<compile_context>
chip_gen: v6e
topology: v6e:2x2x1
jax: 0.10.0
libtpu: 0.0.40
codegen_flags: <defaults>
</compile_context>

<pallas_src>
import jax
import jax.numpy as jnp
from jax import lax
from jax.experimental import pallas as pl
from jax.experimental.pallas import tpu as pltpu


def _fusion_kernel(feats_ref, bev_ref, w3_ref, b3_ref, wab_t_ref, c_t_ref, out_ref):
    # linear3 + ReLU : 80 -> C.  bf16 MXU operands, f32 accumulation / bias / ReLU.
    bev_proj = jnp.dot(bev_ref[...].astype(jnp.bfloat16), w3_ref[...],
                       preferred_element_type=jnp.float32) + b3_ref[...]
    bev_proj = jnp.maximum(bev_proj, 0.0)

    # x = [feats_3d | relu(bev')]  -> (tile_n, 2C), cast once to bf16 for the MXU.
    x = jnp.concatenate([feats_ref[...], bev_proj], axis=-1).astype(jnp.bfloat16)

    # Folded affine tail, computed directly in class-major (transposed) layout:
    #   out_T = W_comb^T @ x^T   via an NT dot (contract last dims of both operands).
    out_t = lax.dot_general(
        wab_t_ref[...], x,
        dimension_numbers=(((1,), (1,)), ((), ())),
        preferred_element_type=jnp.float32)
    # Single lane-dense store: (2NC_pad, tile_n) f32, lane axis = points.
    out_ref[...] = out_t + c_t_ref[...]


def net3dseg_fusion_forward(feats_3d, batch_bev_feats, params, *, tile_n=512):
    """Fusion branch of Net3DSeg.forward (dual_head=True).

    feats_3d:        [N, C]   float32
    batch_bev_feats: [N, 80]  float32
    Returns dict with 'feats', 'seg_logit', 'seg_logit2'.
    """
    N, C = feats_3d.shape
    bev_in = batch_bev_feats.shape[1]
    num_classes = params["w1"].shape[1]

    # The weight folding hard-assumes dual_head=True and concat order [feats_3d, bev_proj].
    assert params["w4"].shape == (2 * C, C), "linear4 must take cat([feats_3d, bev_proj])"
    assert params["w2"].shape == (C, num_classes), "dual_head=True requires linear2 weights"
    assert params["w3"].shape == (bev_in, C)

    nc2 = 2 * num_classes
    nc2_pad = pl.cdiv(nc2, 8) * 8            # sublane-align the class axis

    # ---- Fold linear4 + linear + linear2 into one [2C, 2NC] slab (done on weights) ----
    #   cols [0:NC)     -> seg_logit  = feats@(w4a@w1) + relu(bev')@(w4b@w1) + (b4@w1+b1)
    #   cols [NC:2NC)   -> seg_logit2 = feats@w2                             +  b2
    w4a = params["w4"][:C]
    w4b = params["w4"][C:]
    w_comb = jnp.zeros((2 * C, nc2_pad), jnp.float32)
    w_comb = w_comb.at[:C, :num_classes].set(w4a @ params["w1"])
    w_comb = w_comb.at[C:, :num_classes].set(w4b @ params["w1"])
    w_comb = w_comb.at[:C, num_classes:nc2].set(params["w2"])
    c = jnp.zeros((nc2_pad,), jnp.float32)
    c = c.at[:num_classes].set(params["b4"] @ params["w1"] + params["b1"])
    c = c.at[num_classes:nc2].set(params["b2"])

    # bf16 only for MXU operands; biases stay f32.
    wab_t = w_comb.T.astype(jnp.bfloat16)        # (nc2_pad, 2C)
    c_t = c.reshape(nc2_pad, 1)                  # (nc2_pad, 1) f32
    w3 = params["w3"].astype(jnp.bfloat16)       # (bev_in, C)
    b3 = params["b3"].reshape(1, -1)             # (1, C) f32

    n_tiles = pl.cdiv(N, tile_n)                 # ragged last tile handled by Pallas

    flops = 2 * N * (bev_in * C + 2 * C * nc2_pad)
    bytes_accessed = (N * (C + bev_in) * 4          # f32 inputs
                      + nc2_pad * N * 4             # class-major f32 output
                      + (w3.size + wab_t.size) * 2 + (b3.size + c_t.size) * 4)

    out_t = pl.pallas_call(
        _fusion_kernel,
        out_shape=jax.ShapeDtypeStruct((nc2_pad, N), jnp.float32),
        grid_spec=pltpu.PrefetchScalarGridSpec(
            num_scalar_prefetch=0,
            grid=(n_tiles,),
            in_specs=[
                pl.BlockSpec((tile_n, C), lambda i: (i, 0)),        # feats_3d (f32)
                pl.BlockSpec((tile_n, bev_in), lambda i: (i, 0)),   # bev feats (f32)
                pl.BlockSpec(w3.shape, lambda i: (0, 0)),
                pl.BlockSpec(b3.shape, lambda i: (0, 0)),
                pl.BlockSpec(wab_t.shape, lambda i: (0, 0)),
                pl.BlockSpec(c_t.shape, lambda i: (0, 0)),
            ],
            out_specs=pl.BlockSpec((nc2_pad, tile_n), lambda i: (0, i)),
        ),
        compiler_params=pltpu.CompilerParams(
            dimension_semantics=("parallel",)),
        cost_estimate=pl.CostEstimate(
            flops=flops, transcendentals=0, bytes_accessed=bytes_accessed),
    )(feats_3d, batch_bev_feats, w3, b3, wab_t, c_t)

    # One contiguous row slice of the class-major output, one small transpose, then split.
    logits = out_t[:nc2, :].T                    # (N, 2*num_classes)
    seg_logit = logits[:, :num_classes]
    seg_logit2 = logits[:, num_classes:]
    return {"feats": feats_3d, "seg_logit": seg_logit, "seg_logit2": seg_logit2}


def _init_linear(key, fan_in, fan_out):
    # Deterministic init mimicking nn.Linear: U(-1/sqrt(fan_in), 1/sqrt(fan_in)).
    kw, kb = jax.random.split(key)
    bound = 1.0 / jnp.sqrt(fan_in)
    w = jax.random.uniform(kw, (fan_in, fan_out), jnp.float32, -bound, bound)
    b = jax.random.uniform(kb, (fan_out,), jnp.float32, -bound, bound)
    return w, b


def _reference_forward(feats_3d, bev, params):
    bev_proj = jnp.maximum(bev @ params["w3"] + params["b3"], 0.0)
    fusion = jnp.concatenate([feats_3d, bev_proj], axis=1) @ params["w4"] + params["b4"]
    seg_logit = fusion @ params["w1"] + params["b1"]
    seg_logit2 = feats_3d @ params["w2"] + params["b2"]
    return seg_logit, seg_logit2


if __name__ == "__main__":
    key = jax.random.PRNGKey(0)
    N = 1000         # number of 3D points (deliberately not a multiple of tile_n)
    C = 32           # net_3d.out_channels
    BEV_IN = 80      # linear3 input width (fixed in the module)
    NUM_CLASSES = 8

    k_feats, k_bev, k3, k4, k1, k2, k5 = jax.random.split(key, 7)

    feats_3d = jax.random.normal(k_feats, (N, C), jnp.float32)
    batch_bev_feats = jax.random.normal(k_bev, (N, BEV_IN), jnp.float32)

    w3, b3 = _init_linear(k3, BEV_IN, C)              # linear3: 80 -> C
    w4, b4 = _init_linear(k4, 2 * C, C)               # linear4: 2C -> C
    w1, b1 = _init_linear(k1, C, NUM_CLASSES)         # linear : C -> num_classes
    w2, b2 = _init_linear(k2, C, NUM_CLASSES)         # linear2: C -> num_classes (dual head)
    w5, b5 = _init_linear(k5, BEV_IN, 32)             # linear5: defined in __init__, unused in forward

    params = dict(w3=w3, b3=b3, w4=w4, b4=b4, w1=w1, b1=b1, w2=w2, b2=b2)

    preds = net3dseg_fusion_forward(feats_3d, batch_bev_feats, params)
    jax.block_until_ready(preds)

    ref_logit, ref_logit2 = _reference_forward(feats_3d, batch_bev_feats, params)
    assert preds["seg_logit"].shape == (N, NUM_CLASSES)
    assert preds["seg_logit2"].shape == (N, NUM_CLASSES)
    # bf16 MXU operands with f32 accumulation vs. all-f32 reference -> loose-ish tolerance.
    assert jnp.allclose(preds["seg_logit"], ref_logit, atol=3e-2, rtol=3e-2)
    assert jnp.allclose(preds["seg_logit2"], ref_logit2, atol=3e-2, rtol=3e-2)
    assert jnp.allclose(preds["feats"], feats_3d)

    print("KERNEL_OK")
</pallas_src>

<mosaic_0001>
module attributes {stable_mosaic.version = 11 : i64} {
  func.func @_fusion_kernel(%arg0: i32, %arg1: memref<512x32xf32, #tpu.memory_space<vmem>>, %arg2: memref<512x80xf32, #tpu.memory_space<vmem>>, %arg3: memref<80x32xbf16, #tpu.memory_space<vmem>>, %arg4: memref<1x32xf32, #tpu.memory_space<vmem>>, %arg5: memref<16x64xbf16, #tpu.memory_space<vmem>>, %arg6: memref<16x1xf32, #tpu.memory_space<vmem>>, %arg7: memref<16x512xf32, #tpu.memory_space<vmem>>) attributes {dimension_semantics = [#tpu.dimension_semantics<parallel>], iteration_bounds = array<i64: 2>, scalar_prefetch = 0 : i64, scratch_operands = 0 : i64, tpu.core_type = #tpu.core_type<tc>, window_params = [{transform_indices = @transform_0, window_bounds = array<i64: 512, 32>}, {transform_indices = @transform_1, window_bounds = array<i64: 512, 80>}, {pipeline_mode = #tpu.pipeline_mode<synchronous>, transform_indices = @transform_2, window_bounds = array<i64: 80, 32>}, {pipeline_mode = #tpu.pipeline_mode<synchronous>, transform_indices = @transform_3, window_bounds = array<i64: 1, 32>}, {pipeline_mode = #tpu.pipeline_mode<synchronous>, transform_indices = @transform_4, window_bounds = array<i64: 16, 64>}, {pipeline_mode = #tpu.pipeline_mode<synchronous>, transform_indices = @transform_5, window_bounds = array<i64: 16, 1>}, {transform_indices = @transform_6, window_bounds = array<i64: 16, 512>}]} {
    %c0 = arith.constant 0 : index
    %c0_0 = arith.constant 0 : index
    %0 = vector.load %arg2[%c0, %c0_0] : memref<512x80xf32, #tpu.memory_space<vmem>>, vector<512x80xf32>
    %1 = arith.truncf %0 : vector<512x80xf32> to vector<512x80xbf16>
    %c0_1 = arith.constant 0 : index
    %c0_2 = arith.constant 0 : index
    %2 = vector.load %arg3[%c0_1, %c0_2] : memref<80x32xbf16, #tpu.memory_space<vmem>>, vector<80x32xbf16>
    %cst = arith.constant dense<0.000000e+00> : vector<512x32xf32>
    %3 = tpu.matmul %1, %2, %cst {dimension_numbers = #tpu.dot_dimension_numbers<[1], [0], [0], [1], [0, 0, 1, 1], [], []>} : vector<512x80xbf16>, vector<80x32xbf16>, vector<512x32xf32> -> vector<512x32xf32>
    %c0_3 = arith.constant 0 : index
    %c0_4 = arith.constant 0 : index
    %4 = vector.load %arg4[%c0_3, %c0_4] : memref<1x32xf32, #tpu.memory_space<vmem>>, vector<1x32xf32>
    %5 = vector.broadcast %4 : vector<1x32xf32> to vector<512x32xf32>
    %6 = arith.addf %3, %5 : vector<512x32xf32>
    %cst_5 = arith.constant 0.000000e+00 : f32
    %7 = vector.broadcast %cst_5 : f32 to vector<512x32xf32>
    %8 = arith.maximumf %6, %7 : vector<512x32xf32>
    %c0_6 = arith.constant 0 : index
    %c0_7 = arith.constant 0 : index
    %9 = vector.load %arg1[%c0_6, %c0_7] : memref<512x32xf32, #tpu.memory_space<vmem>>, vector<512x32xf32>
    %10 = tpu.concatenate %9, %8 in 1 : vector<512x32xf32>, vector<512x32xf32> -> vector<512x64xf32>
    %11 = arith.truncf %10 : vector<512x64xf32> to vector<512x64xbf16>
    %c0_8 = arith.constant 0 : index
    %c0_9 = arith.constant 0 : index
    %12 = vector.load %arg5[%c0_8, %c0_9] : memref<16x64xbf16, #tpu.memory_space<vmem>>, vector<16x64xbf16>
    %cst_10 = arith.constant dense<0.000000e+00> : vector<16x512xf32>
    %13 = tpu.matmul %12, %11, %cst_10 {dimension_numbers = #tpu.dot_dimension_numbers<[1], [1], [0], [0], [0, 0, 1, 0], [], []>} : vector<16x64xbf16>, vector<512x64xbf16>, vector<16x512xf32> -> vector<16x512xf32>
    %c0_11 = arith.constant 0 : index
    %c0_12 = arith.constant 0 : index
    %14 = vector.load %arg6[%c0_11, %c0_12] : memref<16x1xf32, #tpu.memory_space<vmem>>, vector<16x1xf32>
    %15 = vector.broadcast %14 : vector<16x1xf32> to vector<16x512xf32>
    %16 = arith.addf %13, %15 : vector<16x512xf32>
    %c0_13 = arith.constant 0 : index
    %c0_14 = arith.constant 0 : index
    %17 = vector.load %arg7[%c0_13, %c0_14] : memref<16x512xf32, #tpu.memory_space<vmem>>, vector<16x512xf32>
    tpu.vector_store %arg7[%c0_13, %c0_14], %16 {strides = array<i32>} : memref<16x512xf32, #tpu.memory_space<vmem>>, vector<16x512xf32>,
    return
  }
  func.func @transform_0(%arg0: i32) -> (i32, i32) {
    %c0_i32 = arith.constant 0 : i32
    %c0_i32_0 = arith.constant 0 : i32
    return %arg0, %c0_i32 : i32, i32
  }
  func.func @transform_1(%arg0: i32) -> (i32, i32) {
    %c0_i32 = arith.constant 0 : i32
    %c0_i32_0 = arith.constant 0 : i32
    return %arg0, %c0_i32 : i32, i32
  }
  func.func @transform_2(%arg0: i32) -> (i32, i32) {
    %c0_i32 = arith.constant 0 : i32
    %c0_i32_0 = arith.constant 0 : i32
    %c0_i32_1 = arith.constant 0 : i32
    return %c0_i32, %c0_i32_0 : i32, i32
  }
  func.func @transform_3(%arg0: i32) -> (i32, i32) {
    %c0_i32 = arith.constant 0 : i32
    %c0_i32_0 = arith.constant 0 : i32
    %c0_i32_1 = arith.constant 0 : i32
    return %c0_i32, %c0_i32_0 : i32, i32
  }
  func.func @transform_4(%arg0: i32) -> (i32, i32) {
    %c0_i32 = arith.constant 0 : i32
    %c0_i32_0 = arith.constant 0 : i32
    %c0_i32_1 = arith.constant 0 : i32
    return %c0_i32, %c0_i32_0 : i32, i32
  }
  func.func @transform_5(%arg0: i32) -> (i32, i32) {
    %c0_i32 = arith.constant 0 : i32
    %c0_i32_0 = arith.constant 0 : i32
    %c0_i32_1 = arith.constant 0 : i32
    return %c0_i32, %c0_i32_0 : i32, i32
  }
  func.func @transform_6(%arg0: i32) -> (i32, i32) {
    %c0_i32 = arith.constant 0 : i32
    %c0_i32_0 = arith.constant 0 : i32
    return %c0_i32, %arg0 : i32, i32
  }
}

</mosaic_0001>

<llo_original>
// kernel: tpu_custom_call.1
$region0: #{tpu_custom_call.1}
  #allocation0 [shape = 'u32[]', space=smem, size = 0x4, offset = 0x4, fixed_abs, tag = 'smem constant byte address 0x4 - core index']
  #allocation1 [shape = 'u32[144,128]{1,0:T(1,128)}', space=vmem, size = 0x12000, scoped, tag = 'internal scratch']
  %s0 = inlined_call_operand.vmem [shape: f32[1000,32], index: 0, kind: input, shape index: {}]
  %s1 = inlined_call_operand.vmem [shape: f32[1000,80], index: 1, kind: input, shape index: {}]
  %s2 = inlined_call_operand.vmem [shape: bf16[80,32], index: 2, kind: input, shape index: {}]
  %s3 = inlined_call_operand.vmem [shape: f32[1,32], index: 3, kind: input, shape index: {}]
  %s4 = inlined_call_operand.vmem [shape: bf16[16,64], index: 4, kind: input, shape index: {}]
  %s5 = inlined_call_operand.vmem [shape: f32[16,1], index: 5, kind: input, shape index: {}]
  %s6 = inlined_call_operand.hbm [shape: f32[16,1000], index: 6, kind: output, shape index: {}]
  %s7 = sld [smem:[#allocation0]]
  $region57: #{tpu_custom_call.1} parent=0
    _
  %s9 = ssub.s32 1, %s7
  %s10 = scalar_select 0, %s9, %s7
  $region1: #{tpu_custom_call.1} parent=0
    #allocation2 [shape = 'u8[65536]{0}', space=vmem, size = 0x10000, scoped, tag = 'output window, operand 0']
    #allocation3 [shape = 's32[2]{0}', space=sflag, size = 0x8, scoped, tag = 'scoped memory for tpu_custom_call.1']
    %11 = vsyncpa [#allocation3], 0
    %s12 = scalar_lea.sflag [#allocation3], 1
    %13 = vsyncpa %s12, 0
    loop: start=0, step=1, limit=4
    $region2: #{tpu_custom_call.1} parent=1 // loop_pre_header
      _
    $region3: #{tpu_custom_call.1} parent=1 // loop_header
      %s15 = sphi 0, %s19
      %p16 = scmp.ge.s32.totalorder %s15, 4
      %s25 = sphi 0, %s27
      %s28 = sphi 0, %s25
      %s29 = sphi 0, %s28
      %s45 = sphi 0, %s29
      %s51 = sphi 0, %s53
      %s54 = sphi 0, %s51
      %s55 = sphi 0, %s54
      %s71 = sphi 0, %s55
      %s75 = sphi 0, %s75
      %s77 = sphi 0, %s75
      %s78 = sphi 0, %s77
      %s92 = sphi 0, %s78
      %s96 = sphi 0, %s96
      %s98 = sphi 0, %s96
      %s99 = sphi 0, %s98
      %s113 = sphi 0, %s99
      %s117 = sphi 0, %s117
      %s119 = sphi 0, %s117
      %s120 = sphi 0, %s119
      %s134 = sphi 0, %s120
      %s138 = sphi 0, %s138
      %s140 = sphi 0, %s138
      %s141 = sphi 0, %s140
      %s155 = sphi 0, %s141
      %s161 = sphi 0, %s163
      %s164 = sphi 0, %s161
      %s165 = sphi 0, %s164
      %s181 = sphi 0, %s165
    $region4: #{tpu_custom_call.1} parent=1 // loop_header_branch
      %18 = sbr.rel (%p16) target = $region8
    $region5: #{tpu_custom_call.1} parent=1 // loop_body
      %s20 = ssub.s32 %s15, 1
      %s21 = ssub.s32 %s15, 2
      %s22 = sadd.s32 %s15, 1
      %s23 = ssub.s32 %s15, %s22
      %p24 = scmp.eq.s32.totalorder %s23, 0
      %s26 = sadd.s32 %s25, 1
      %s27 = scalar_select %p24, %s25, %s26
      %p30 = pneg %p24
      %p31 = scmp.eq.s32.totalorder %s15, 1
      %p32 = por %p30, %p31
      %p33 = scmp.ne.s32.totalorder %s25, %s28
      %p34 = scmp.eq.s32.totalorder %s15, 0
      %p35 = por %p33, %p34
      %p36 = scmp.ne.s32.totalorder %s25, %s28
      %p37 = scmp.eq.s32.totalorder %s20, 1
      %p38 = por %p36, %p37
      %p39 = scmp.ne.s32.totalorder %s28, %s29
      %p40 = scmp.eq.s32.totalorder %s20, 0
      %p41 = por %p39, %p40
      %p42 = scmp.ne.s32.totalorder %s28, %s29
      %p43 = scmp.eq.s32.totalorder %s21, 1
      %p44 = por %p42, %p43
      %p46 = scmp.ne.s32.totalorder %s29, %s45
      %p47 = scmp.eq.s32.totalorder %s21, 0
      %p48 = por %p46, %p47
      %s49 = ssub.s32 %s15, %s22
      %p50 = scmp.eq.s32.totalorder %s49, 0
      %s52 = sadd.s32 %s51, 1
      %s53 = scalar_select %p50, %s51, %s52
      %p56 = pneg %p50
      %p57 = scmp.eq.s32.totalorder %s15, 1
      %p58 = por %p56, %p57
      %p59 = scmp.ne.s32.totalorder %s51, %s54
      %p60 = scmp.eq.s32.totalorder %s15, 0
      %p61 = por %p59, %p60
      %p62 = scmp.ne.s32.totalorder %s51, %s54
      %p63 = scmp.eq.s32.totalorder %s20, 1
      %p64 = por %p62, %p63
      %p65 = scmp.ne.s32.totalorder %s54, %s55
      %p66 = scmp.eq.s32.totalorder %s20, 0
      %p67 = por %p65, %p66
      %p68 = scmp.ne.s32.totalorder %s54, %s55
      %p69 = scmp.eq.s32.totalorder %s21, 1
      %p70 = por %p68, %p69
      %p72 = scmp.ne.s32.totalorder %s55, %s71
      %p73 = scmp.eq.s32.totalorder %s21, 0
      %p74 = por %p72, %p73
      %s76 = sadd.s32 %s75, 1
      %p79 = scmp.eq.s32.totalorder %s15, 1
      %p80 = scmp.ne.s32.totalorder %s75, %s77
      %p81 = scmp.eq.s32.totalorder %s15, 0
      %p82 = por %p80, %p81
      %p83 = scmp.ne.s32.totalorder %s75, %s77
      %p84 = scmp.eq.s32.totalorder %s20, 1
      %p85 = por %p83, %p84
      %p86 = scmp.ne.s32.totalorder %s77, %s78
      %p87 = scmp.eq.s32.totalorder %s20, 0
      %p88 = por %p86, %p87
      %p89 = scmp.ne.s32.totalorder %s77, %s78
      %p90 = scmp.eq.s32.totalorder %s21, 1
      %p91 = por %p89, %p90
      %p93 = scmp.ne.s32.totalorder %s78, %s92
      %p94 = scmp.eq.s32.totalorder %s21, 0
      %p95 = por %p93, %p94
      %s97 = sadd.s32 %s96, 1
      %p100 = scmp.eq.s32.totalorder %s15, 1
      %p101 = scmp.ne.s32.totalorder %s96, %s98
      %p102 = scmp.eq.s32.totalorder %s15, 0
      %p103 = por %p101, %p102
      %p104 = scmp.ne.s32.totalorder %s96, %s98
      %p105 = scmp.eq.s32.totalorder %s20, 1
      %p106 = por %p104, %p105
      %p107 = scmp.ne.s32.totalorder %s98, %s99
      %p108 = scmp.eq.s32.totalorder %s20, 0
      %p109 = por %p107, %p108
      %p110 = scmp.ne.s32.totalorder %s98, %s99
      %p111 = scmp.eq.s32.totalorder %s21, 1
      %p112 = por %p110, %p111
      %p114 = scmp.ne.s32.totalorder %s99, %s113
      %p115 = scmp.eq.s32.totalorder %s21, 0
      %p116 = por %p114, %p115
      %s118 = sadd.s32 %s117, 1
      %p121 = scmp.eq.s32.totalorder %s15, 1
      %p122 = scmp.ne.s32.totalorder %s117, %s119
      %p123 = scmp.eq.s32.totalorder %s15, 0
      %p124 = por %p122, %p123
      %p125 = scmp.ne.s32.totalorder %s117, %s119
      %p126 = scmp.eq.s32.totalorder %s20, 1
      %p127 = por %p125, %p126
      %p128 = scmp.ne.s32.totalorder %s119, %s120
      %p129 = scmp.eq.s32.totalorder %s20, 0
      %p130 = por %p128, %p129
      %p131 = scmp.ne.s32.totalorder %s119, %s120
      %p132 = scmp.eq.s32.totalorder %s21, 1
      %p133 = por %p131, %p132
      %p135 = scmp.ne.s32.totalorder %s120, %s134
      %p136 = scmp.eq.s32.totalorder %s21, 0
      %p137 = por %p135, %p136
      %s139 = sadd.s32 %s138, 1
      %p142 = scmp.eq.s32.totalorder %s15, 1
      %p143 = scmp.ne.s32.totalorder %s138, %s140
      %p144 = scmp.eq.s32.totalorder %s15, 0
      %p145 = por %p143, %p144
      %p146 = scmp.ne.s32.totalorder %s138, %s140
      %p147 = scmp.eq.s32.totalorder %s20, 1
      %p148 = por %p146, %p147
      %p149 = scmp.ne.s32.totalorder %s140, %s141
      %p150 = scmp.eq.s32.totalorder %s20, 0
      %p151 = por %p149, %p150
      %p152 = scmp.ne.s32.totalorder %s140, %s141
      %p153 = scmp.eq.s32.totalorder %s21, 1
      %p154 = por %p152, %p153
      %p156 = scmp.ne.s32.totalorder %s141, %s155
      %p157 = scmp.eq.s32.totalorder %s21, 0
      %p158 = por %p156, %p157
      %s159 = ssub.s32 %s15, %s22
      %p160 = scmp.eq.s32.totalorder %s159, 0
      %s162 = sadd.s32 %s161, 1
      %s163 = scalar_select %p160, %s161, %s162
      %p166 = pneg %p160
      %p167 = scmp.eq.s32.totalorder %s15, 1
      %p168 = por %p166, %p167
      %p169 = scmp.ne.s32.totalorder %s161, %s164
      %p170 = scmp.eq.s32.totalorder %s15, 0
      %p171 = por %p169, %p170
      %p172 = scmp.ne.s32.totalorder %s161, %s164
      %p173 = scmp.eq.s32.totalorder %s20, 1
      %p174 = por %p172, %p173
      %p175 = scmp.ne.s32.totalorder %s164, %s165
      %p176 = scmp.eq.s32.totalorder %s20, 0
      %p177 = por %p175, %p176
      %p178 = scmp.ne.s32.totalorder %s164, %s165
      %p179 = scmp.eq.s32.totalorder %s21, 1
      %p180 = por %p178, %p179
      %p182 = scmp.ne.s32.totalorder %s165, %s181
      %p183 = scmp.eq.s32.totalorder %s21, 0
      %p184 = por %p182, %p183
      %p185 = scmp.le.s32.totalorder 1, %s15
      %p186 = scmp.lt.s32.totalorder %s15, 3
      %p187 = pnand %p185, %p186
      %p188 = pneg %p187
      // Predicated region
      $region9: #{tpu_custom_call.1} parent=5 // pred_check
        _
      $region10: #{tpu_custom_call.1} parent=5 // pred_check_branch
        %190 = sbr.rel (%p187) target = $region12
      $region11: #{tpu_custom_call.1} parent=5 // pred_region
        %s191 = ssub.s32 %s15, 1
        // Predicated region
        $region13: #{tpu_custom_call.1} parent=11 // pred_check
          %p192 = pneg %p88
        $region14: #{tpu_custom_call.1} parent=11 // pred_check_branch
          %194 = sbr.rel (%p192) target = $region16
        $region15: #{tpu_custom_call.1} parent=11 // pred_region
          _
        $region16: #{tpu_custom_call.1} parent=11 // pred_fallthru
          _
        // Predicated region
        $region17: #{tpu_custom_call.1} parent=11 // pred_check
          %p195 = pneg %p109
        $region18: #{tpu_custom_call.1} parent=11 // pred_check_branch
          %197 = sbr.rel (%p195) target = $region20
        $region19: #{tpu_custom_call.1} parent=11 // pred_region
          _
        $region20: #{tpu_custom_call.1} parent=11 // pred_fallthru
          _
        // Predicated region
        $region21: #{tpu_custom_call.1} parent=11 // pred_check
          %p198 = pneg %p130
        $region22: #{tpu_custom_call.1} parent=11 // pred_check_branch
          %200 = sbr.rel (%p198) target = $region24
        $region23: #{tpu_custom_call.1} parent=11 // pred_region
          _
        $region24: #{tpu_custom_call.1} parent=11 // pred_fallthru
          _
        // Predicated region
        $region25: #{tpu_custom_call.1} parent=11 // pred_check
          %p201 = pneg %p151
        $region26: #{tpu_custom_call.1} parent=11 // pred_check_branch
          %203 = sbr.rel (%p201) target = $region28
        $region27: #{tpu_custom_call.1} parent=11 // pred_region
          _
        $region28: #{tpu_custom_call.1} parent=11 // pred_fallthru
          _
      $region12: #{tpu_custom_call.1} parent=5 // pred_fallthru
        _
      %p204 = scmp.lt.s32.totalorder %s15, 2
      // Predicated region
      $region29: #{tpu_custom_call.1} parent=5 // pred_check
        %p205 = pneg %p204
      $region30: #{tpu_custom_call.1} parent=5 // pred_check_branch
        %207 = sbr.rel (%p205) target = $region32
      $region31: #{tpu_custom_call.1} parent=5 // pred_region
        // Predicated region
        $region33: #{tpu_custom_call.1} parent=31 // pred_check
          %p208 = pneg %p35
        $region34: #{tpu_custom_call.1} parent=31 // pred_check_branch
          %210 = sbr.rel (%p208) target = $region36
        $region35: #{tpu_custom_call.1} parent=31 // pred_region
          %s211 = smul.u32 64, %s15
          %s212 = ssub.s32 125, %s211
          %p213 = scmp.lt.s32.totalorder %s212, 64
          %s214 = scalar_select %p213, %s212, 64
          %s215 = smul.u32 128, %s214
          %p216 = scmp.lt.s32.totalorder %s211, 124
          %s217 = scalar_select %p216, %s211, 124
          %s218 = smul.addr %s217, 8
          %s219 = scalar_lea.vmem %s0, %s218
          %s220 = smul.u32 64, %s15
          %s221 = ssub.s32 125, %s220
          %p222 = scmp.lt.s32.totalorder %s221, 64
          %s223 = scalar_select %p222, %s221, 64
          %s224 = smul.u32 128, %s223
        $region36: #{tpu_custom_call.1} parent=31 // pred_fallthru
          _
        // Predicated region
        $region37: #{tpu_custom_call.1} parent=31 // pred_check
          %p225 = pneg %p61
        $region38: #{tpu_custom_call.1} parent=31 // pred_check_branch
          %227 = sbr.rel (%p225) target = $region40
        $region39: #{tpu_custom_call.1} parent=31 // pred_region
          %s228 = smul.u32 64, %s15
          %s229 = ssub.s32 125, %s228
          %p230 = scmp.lt.s32.totalorder %s229, 64
          %s231 = scalar_select %p230, %s229, 64
          %s232 = smul.u32 128, %s231
          %p233 = scmp.lt.s32.totalorder %s228, 124
          %s234 = scalar_select %p233, %s228, 124
          %s235 = smul.addr %s234, 8
          %s236 = scalar_lea.vmem %s1, %s235
          %s237 = smul.u32 64, %s15
          %s238 = ssub.s32 125, %s237
          %p239 = scmp.lt.s32.totalorder %s238, 64
          %s240 = scalar_select %p239, %s238, 64
          %s241 = smul.u32 128, %s240
        $region40: #{tpu_custom_call.1} parent=31 // pred_fallthru
          _
      $region32: #{tpu_custom_call.1} parent=5 // pred_fallthru
        _
      %p242 = scmp.le.s32.totalorder 1, %s15
      %p243 = scmp.lt.s32.totalorder %s15, 3
      %p244 = pnand %p242, %p243
      %p245 = pneg %p244
      // Predicated region
      $region41: #{tpu_custom_call.1} parent=5 // pred_check
        _
      $region42: #{tpu_custom_call.1} parent=5 // pred_check_branch
        %247 = sbr.rel (%p244) target = $region44
      $region43: #{tpu_custom_call.1} parent=5 // pred_region
        %s248 = ssub.s32 %s15, 1
        %s249 = smul.u32 64, %s20
        %s250 = ssub.s32 125, %s249
        %p251 = scmp.lt.s32.totalorder %s250, 64
        %s252 = scalar_select %p251, %s250, 64
        %s253 = smul.u32 128, %s252
        %p254 = scmp.lt.s32.totalorder %s249, 124
        %s255 = scalar_select %p254, %s249, 124
        %s256 = smul.addr %s255, 8
        %s257 = scalar_lea.vmem %s0, %s256
        %p258 = pneg %p41
        %p259 = pneg %p38
        %s260 = smul.u32 64, %s20
        %s261 = ssub.s32 125, %s260
        %p262 = scmp.lt.s32.totalorder %s261, 64
        %s263 = scalar_select %p262, %s261, 64
        %s264 = smul.u32 128, %s263
        %p265 = scmp.lt.s32.totalorder %s260, 124
        %s266 = scalar_select %p265, %s260, 124
        %s267 = smul.addr %s266, 8
        %s268 = scalar_lea.vmem %s1, %s267
        %p269 = pneg %p67
        %p270 = pneg %p64
        %p271 = pneg %p88
        %p272 = pneg %p85
        %p273 = pneg %p109
        %p274 = pneg %p106
        %p275 = pneg %p130
        %p276 = pneg %p127
        %p277 = pneg %p151
        %p278 = pneg %p148
        %p279 = pneg %p177
        %p280 = pneg %p174
        %s281 = sand.u32 %s164, 1
        %s282 = scalar_lea.sflag [#allocation3], %s281
        %s283 = sand.u32 %s164, 1
        %s284 = smul.addr %s283, 64
        %s285 = scalar_lea.vmem [#allocation2], %s284
        %s286 = smul.u32 64, %s20
        %s287 = ssub.s32 125, %s286
        %p288 = scmp.lt.s32.totalorder %s287, 64
        %s289 = scalar_select %p288, %s287, 64
        %s290 = smul.u32 128, %s289
        %p291 = scmp.lt.s32.totalorder %s286, 124
        %s292 = scalar_select %p291, %s286, 124
        %s293 = smul.addr %s292, 8
        %s294 = scalar_lea.vmem %s0, %s293
        %s295 = smul.u32 64, %s20
        %s296 = ssub.s32 125, %s295
        %p297 = scmp.lt.s32.totalorder %s296, 64
        %s298 = scalar_select %p297, %s296, 64
        %s299 = smul.u32 128, %s298
        %s300 = smul.u32 64, %s20
        %s301 = ssub.s32 125, %s300
        %p302 = scmp.lt.s32.totalorder %s301, 64
        %s303 = scalar_select %p302, %s301, 64
        %s304 = smul.u32 128, %s303
        %p305 = scmp.lt.s32.totalorder %s300, 124
        %s306 = scalar_select %p305, %s300, 124
        %s307 = smul.addr %s306, 8
        %s308 = scalar_lea.vmem %s1, %s307
        %s309 = smul.u32 64, %s20
        %s310 = ssub.s32 125, %s309
        %p311 = scmp.lt.s32.totalorder %s310, 64
        %s312 = scalar_select %p311, %s310, 64
        %s313 = smul.u32 128, %s312
        %s314 = smul.u32 4, %s20
        %v316 = vld [vmem:[%s308] sm:$0xff]
        %v317 = vld [vmem:[%s308 + $0x8] sm:$0xff]
        %v318 = vld [vmem:[%s308 + $0x10] sm:$0xff]
        %v319 = vld [vmem:[%s308 + $0x18] sm:$0xff]
        %v320 = vld [vmem:[%s308 + $0x20] sm:$0xff]
        %v321 = vld [vmem:[%s308 + $0x28] sm:$0xff]
        %v322 = vld [vmem:[%s308 + $0x30] sm:$0xff]
        %v323 = vld [vmem:[%s308 + $0x38] sm:$0xff]
        %v324 = vld [vmem:[%s308 + $0x40] sm:$0xff]
        %v325 = vld [vmem:[%s308 + $0x48] sm:$0xff]
        %v326 = vld [vmem:[%s308 + $0x50] sm:$0xff]
        %v327 = vld [vmem:[%s308 + $0x58] sm:$0xff]
        %v328 = vld [vmem:[%s308 + $0x60] sm:$0xff]
        %v329 = vld [vmem:[%s308 + $0x68] sm:$0xff]
        %v330 = vld [vmem:[%s308 + $0x70] sm:$0xff]
        %v331 = vld [vmem:[%s308 + $0x78] sm:$0xff]
        %v332 = vld [vmem:[%s308 + $0x80] sm:$0xff]
        %v333 = vld [vmem:[%s308 + $0x88] sm:$0xff]
        %v334 = vld [vmem:[%s308 + $0x90] sm:$0xff]
        %v335 = vld [vmem:[%s308 + $0x98] sm:$0xff]
        %v336 = vld [vmem:[%s308 + $0xa0] sm:$0xff]
        %v337 = vld [vmem:[%s308 + $0xa8] sm:$0xff]
        %v338 = vld [vmem:[%s308 + $0xb0] sm:$0xff]
        %v339 = vld [vmem:[%s308 + $0xb8] sm:$0xff]
        %v340 = vld [vmem:[%s308 + $0xc0] sm:$0xff]
        %v341 = vld [vmem:[%s308 + $0xc8] sm:$0xff]
        %v342 = vld [vmem:[%s308 + $0xd0] sm:$0xff]
        %v343 = vld [vmem:[%s308 + $0xd8] sm:$0xff]
        %v344 = vld [vmem:[%s308 + $0xe0] sm:$0xff]
        %v345 = vld [vmem:[%s308 + $0xe8] sm:$0xff]
        %v346 = vld [vmem:[%s308 + $0xf0] sm:$0xff]
        %v347 = vld [vmem:[%s308 + $0xf8] sm:$0xff]
        %v348 = vld [vmem:[%s308 + $0x100] sm:$0xff]
        %v349 = vld [vmem:[%s308 + $0x108] sm:$0xff]
        %v350 = vld [vmem:[%s308 + $0x110] sm:$0xff]
        %v351 = vld [vmem:[%s308 + $0x118] sm:$0xff]
        %v352 = vld [vmem:[%s308 + $0x120] sm:$0xff]
        %v353 = vld [vmem:[%s308 + $0x128] sm:$0xff]
        %v354 = vld [vmem:[%s308 + $0x130] sm:$0xff]
        %v355 = vld [vmem:[%s308 + $0x138] sm:$0xff]
        %v356 = vld [vmem:[%s308 + $0x140] sm:$0xff]
        %v357 = vld [vmem:[%s308 + $0x148] sm:$0xff]
        %v358 = vld [vmem:[%s308 + $0x150] sm:$0xff]
        %v359 = vld [vmem:[%s308 + $0x158] sm:$0xff]
        %v360 = vld [vmem:[%s308 + $0x160] sm:$0xff]
        %v361 = vld [vmem:[%s308 + $0x168] sm:$0xff]
        %v362 = vld [vmem:[%s308 + $0x170] sm:$0xff]
        %v363 = vld [vmem:[%s308 + $0x178] sm:$0xff]
        %v364 = vld [vmem:[%s308 + $0x180] sm:$0xff]
        %v365 = vld [vmem:[%s308 + $0x188] sm:$0xff]
        %v366 = vld [vmem:[%s308 + $0x190] sm:$0xff]
        %v367 = vld [vmem:[%s308 + $0x198] sm:$0xff]
        %v368 = vld [vmem:[%s308 + $0x1a0] sm:$0xff]
        %v369 = vld [vmem:[%s308 + $0x1a8] sm:$0xff]
        %v370 = vld [vmem:[%s308 + $0x1b0] sm:$0xff]
        %v371 = vld [vmem:[%s308 + $0x1b8] sm:$0xff]
        %v372 = vld [vmem:[%s308 + $0x1c0] sm:$0xff]
        %v373 = vld [vmem:[%s308 + $0x1c8] sm:$0xff]
        %v374 = vld [vmem:[%s308 + $0x1d0] sm:$0xff]
        %v375 = vld [vmem:[%s308 + $0x1d8] sm:$0xff]
        %v376 = vld [vmem:[%s308 + $0x1e0] sm:$0xff]
        %v377 = vld [vmem:[%s308 + $0x1e8] sm:$0xff]
        %v378 = vld [vmem:[%s308 + $0x1f0] sm:$0xff]
        %v379 = vld [vmem:[%s308 + $0x1f8] sm:$0xff]
        %v380 = vpack.c.bf16 %v317, %v316
        %v381 = vpack.c.bf16 %v319, %v318
        %v382 = vpack.c.bf16 %v321, %v320
        %v383 = vpack.c.bf16 %v323, %v322
        %v384 = vpack.c.bf16 %v325, %v324
        %v385 = vpack.c.bf16 %v327, %v326
        %v386 = vpack.c.bf16 %v329, %v328
        %v387 = vpack.c.bf16 %v331, %v330
        %v388 = vpack.c.bf16 %v333, %v332
        %v389 = vpack.c.bf16 %v335, %v334
        %v390 = vpack.c.bf16 %v337, %v336
        %v391 = vpack.c.bf16 %v339, %v338
        %v392 = vpack.c.bf16 %v341, %v340
        %v393 = vpack.c.bf16 %v343, %v342
        %v394 = vpack.c.bf16 %v345, %v344
        %v395 = vpack.c.bf16 %v347, %v346
        %v396 = vpack.c.bf16 %v349, %v348
        %v397 = vpack.c.bf16 %v351, %v350
        %v398 = vpack.c.bf16 %v353, %v352
        %v399 = vpack.c.bf16 %v355, %v354
        %v400 = vpack.c.bf16 %v357, %v356
        %v401 = vpack.c.bf16 %v359, %v358
        %v402 = vpack.c.bf16 %v361, %v360
        %v403 = vpack.c.bf16 %v363, %v362
        %v404 = vpack.c.bf16 %v365, %v364
        %v405 = vpack.c.bf16 %v367, %v366
        %v406 = vpack.c.bf16 %v369, %v368
        %v407 = vpack.c.bf16 %v371, %v370
        %v408 = vpack.c.bf16 %v373, %v372
        %v409 = vpack.c.bf16 %v375, %v374
        %v410 = vpack.c.bf16 %v377, %v376
        %v411 = vpack.c.bf16 %v379, %v378
        %v412 = vld [vmem:[%s2] sm:$0xf]
        %v413 = vld [vmem:[%s2 + $0x4] sm:$0xf]
        %v414 = vld [vmem:[%s2 + $0x8] sm:$0xf]
        %v415 = vld [vmem:[%s2 + $0xc] sm:$0xf]
        %v416 = vld [vmem:[%s2 + $0x10] sm:$0xf]
        %v417 = vld [vmem:[%s2 + $0x14] sm:$0xf]
        %v418 = vld [vmem:[%s2 + $0x18] sm:$0xf]
        %v419 = vld [vmem:[%s2 + $0x1c] sm:$0xf]
        %v420 = vld [vmem:[%s2 + $0x20] sm:$0xf]
        %v421 = vld [vmem:[%s2 + $0x24] sm:$0xf]
        %v422 = vld [vmem:[%s3] sm:$0x1]
        %v424 = vlaneseq
        %v425 = vshrl.u32 %v424, 7
        %v426 = vsub.s32 0, %v425
        %v427 = vrot.slane %v422, %v426
        %v439 = vunpack.c.l.b16 %v412
        %v440 = vunpack.c.l.b16 %v413
        %v441 = vunpack.c.l.b16 %v414
        %v442 = vunpack.c.l.b16 %v415
        %v443 = vunpack.c.l.b16 %v416
        %v444 = vunpack.c.l.b16 %v417
        %v445 = vunpack.c.l.b16 %v418
        %v446 = vunpack.c.l.b16 %v419
        %v447 = vunpack.c.l.b16 %v420
        %v448 = vunpack.c.l.b16 %v421
        %v449 = vpack.c.b16 %v440, %v439
        %v450 = vpack.c.b16 %v442, %v441
        %v451 = vpack.c.b16 %v444, %v443
        %v452 = vpack.c.b16 %v446, %v445
        %v453 = vpack.c.b16 %v448, %v447
        %vm459 = vcmask 654336
        %v461 = vsel %vm459, %v380, 0
        %v464 = vsel %vm459, %v381, 0
        %v467 = vsel %vm459, %v382, 0
        %v470 = vsel %vm459, %v383, 0
        %v473 = vsel %vm459, %v384, 0
        %v476 = vsel %vm459, %v385, 0
        %v479 = vsel %vm459, %v386, 0
        %v482 = vsel %vm459, %v387, 0
        %v485 = vsel %vm459, %v388, 0
        %v488 = vsel %vm459, %v389, 0
        %v491 = vsel %vm459, %v390, 0
        %v494 = vsel %vm459, %v391, 0
        %v497 = vsel %vm459, %v392, 0
        %v500 = vsel %vm459, %v393, 0
        %v503 = vsel %vm459, %v394, 0
        %v506 = vsel %vm459, %v395, 0
        %v509 = vsel %vm459, %v396, 0
        %v512 = vsel %vm459, %v397, 0
        %v515 = vsel %vm459, %v398, 0
        %v518 = vsel %vm459, %v399, 0
        %v521 = vsel %vm459, %v400, 0
        %v524 = vsel %vm459, %v401, 0
        %v527 = vsel %vm459, %v402, 0
        %v530 = vsel %vm459, %v403, 0
        %v533 = vsel %vm459, %v404, 0
        %v536 = vsel %vm459, %v405, 0
        %v539 = vsel %vm459, %v406, 0
        %v542 = vsel %vm459, %v407, 0
        %v545 = vsel %vm459, %v408, 0
        %v548 = vsel %vm459, %v409, 0
        %v551 = vsel %vm459, %v410, 0
        %v554 = vsel %vm459, %v411, 0
        %556 = vmatprep.subr.bf16.mxu0 0
        %557 = vmatpush1.bf16.msra.mxu0 0
        %558 = vmatprep.subr.bf16.mxu0 0
        %559 = vmatpush1.bf16.msra.mxu0 0
        %560 = vmatprep.subr.bf16.mxu0 0
        %561 = vmatpush1.bf16.msra.mxu0 0
        %562 = vmatprep.subr.bf16.mxu0 0
        %563 = vmatpush1.bf16.msra.mxu0 %v453
        %564 = vmatprep.subr.bf16.mxu0 0
        %565 = vmatpush1.bf16.msra.mxu0 %v452
        %566 = vmatprep.subr.bf16.mxu0 0
        %567 = vmatpush1.bf16.msra.mxu0 %v451
        %568 = vmatprep.subr.bf16.mxu0 0
        %569 = vmatpush1.bf16.msra.mxu0 %v450
        %570 = vmatprep.subr.bf16.mxu0 0
        %571 = vmatpush1.bf16.msra.mxu0 %v449
        %572 = vmatprep.subr.bf16.mxu0 0
        %573 = vmatpush2.bf16.msra.mxu0 0
        %574 = vmatprep.subr.bf16.mxu0 0
        %575 = vmatpush2.bf16.msra.mxu0 0
        %576 = vmatprep.subr.bf16.mxu0 0
        %577 = vmatpush2.bf16.msra.mxu0 0
        %578 = vmatprep.subr.bf16.mxu0 0
        %579 = vmatpush2.bf16.msra.mxu0 0
        %580 = vmatprep.subr.bf16.mxu0 0
        %581 = vmatpush2.bf16.msra.mxu0 0
        %582 = vmatprep.subr.bf16.mxu0 0
        %583 = vmatpush2.bf16.msra.mxu0 0
        %584 = vmatprep.subr.bf16.mxu0 0
        %585 = vmatpush2.bf16.msra.mxu0 0
        %586 = vmatprep.subr.bf16.mxu0 0
        %587 = vmatpush2.bf16.msra.mxu0 0
        %588 = vmatprep.mubr.bf16.mxu0 0
        %589 = vmatmul.mubr.bf16.gmra.mxu0 %v461
        %v590 = vpop.f32.mrf.mxu0
        %v591 = vadd.f32 %v427, %v590
        %v592 = vpop.f32.mrf.mxu0
        %v593 = vpop.f32.mrf.mxu0
        %v594 = vadd.f32 %v427, %v593
        %v595 = vpop.f32.mrf.mxu0
        %596 = vmatprep.mubr.bf16.mxu0 0
        %597 = vmatmul.mubr.bf16.gmra.mxu0 %v464
        %v598 = vpop.f32.mrf.mxu0
        %v599 = vadd.f32 %v427, %v598
        %v600 = vpop.f32.mrf.mxu0
        %v601 = vpop.f32.mrf.mxu0
        %v602 = vadd.f32 %v427, %v601
        %v603 = vpop.f32.mrf.mxu0
        %604 = vmatprep.mubr.bf16.mxu0 0
        %605 = vmatmul.mubr.bf16.gmra.mxu0 %v467
        %v606 = vpop.f32.mrf.mxu0
        %v607 = vadd.f32 %v427, %v606
        %v608 = vpop.f32.mrf.mxu0
        %v609 = vpop.f32.mrf.mxu0
        %v610 = vadd.f32 %v427, %v609
        %v611 = vpop.f32.mrf.mxu0
        %612 = vmatprep.mubr.bf16.mxu0 0
        %613 = vmatmul.mubr.bf16.gmra.mxu0 %v470
        %v614 = vpop.f32.mrf.mxu0
        %v615 = vadd.f32 %v427, %v614
        %v616 = vpop.f32.mrf.mxu0
        %v617 = vpop.f32.mrf.mxu0
        %v618 = vadd.f32 %v427, %v617
        %v619 = vpop.f32.mrf.mxu0
        %620 = vmatprep.mubr.bf16.mxu0 0
        %621 = vmatmul.mubr.bf16.gmra.mxu0 %v473
        %v622 = vpop.f32.mrf.mxu0
        %v623 = vadd.f32 %v427, %v622
        %v624 = vpop.f32.mrf.mxu0
        %v625 = vpop.f32.mrf.mxu0
        %v626 = vadd.f32 %v427, %v625
        %v627 = vpop.f32.mrf.mxu0
        %628 = vmatprep.mubr.bf16.mxu0 0
        %629 = vmatmul.mubr.bf16.gmra.mxu0 %v476
        %v630 = vpop.f32.mrf.mxu0
        %v631 = vadd.f32 %v427, %v630
        %v632 = vpop.f32.mrf.mxu0
        %v633 = vpop.f32.mrf.mxu0
        %v634 = vadd.f32 %v427, %v633
        %v635 = vpop.f32.mrf.mxu0
        %636 = vmatprep.mubr.bf16.mxu0 0
        %637 = vmatmul.mubr.bf16.gmra.mxu0 %v479
        %v638 = vpop.f32.mrf.mxu0
        %v639 = vadd.f32 %v427, %v638
        %v640 = vpop.f32.mrf.mxu0
        %v641 = vpop.f32.mrf.mxu0
        %v642 = vadd.f32 %v427, %v641
        %v643 = vpop.f32.mrf.mxu0
        %644 = vmatprep.mubr.bf16.mxu0 0
        %645 = vmatmul.mubr.bf16.gmra.mxu0 %v482
        %v646 = vpop.f32.mrf.mxu0
        %v647 = vadd.f32 %v427, %v646
        %v648 = vpop.f32.mrf.mxu0
        %v649 = vpop.f32.mrf.mxu0
        %v650 = vadd.f32 %v427, %v649
        %v651 = vpop.f32.mrf.mxu0
        %652 = vmatprep.mubr.bf16.mxu0 0
        %653 = vmatmul.mubr.bf16.gmra.mxu0 %v485
        %v654 = vpop.f32.mrf.mxu0
        %v655 = vadd.f32 %v427, %v654
        %v656 = vpop.f32.mrf.mxu0
        %v657 = vpop.f32.mrf.mxu0
        %v658 = vadd.f32 %v427, %v657
        %v659 = vpop.f32.mrf.mxu0
        %660 = vmatprep.mubr.bf16.mxu0 0
        %661 = vmatmul.mubr.bf16.gmra.mxu0 %v488
        %v662 = vpop.f32.mrf.mxu0
        %v663 = vadd.f32 %v427, %v662
        %v664 = vpop.f32.mrf.mxu0
        %v665 = vpop.f32.mrf.mxu0
        %v666 = vadd.f32 %v427, %v665
        %v667 = vpop.f32.mrf.mxu0
        %668 = vmatprep.mubr.bf16.mxu0 0
        %669 = vmatmul.mubr.bf16.gmra.mxu0 %v491
        %v670 = vpop.f32.mrf.mxu0
        %v671 = vadd.f32 %v427, %v670
        %v672 = vpop.f32.mrf.mxu0
        %v673 = vpop.f32.mrf.mxu0
        %v674 = vadd.f32 %v427, %v673
        %v675 = vpop.f32.mrf.mxu0
        %676 = vmatprep.mubr.bf16.mxu0 0
        %677 = vmatmul.mubr.bf16.gmra.mxu0 %v494
        %v678 = vpop.f32.mrf.mxu0
        %v679 = vadd.f32 %v427, %v678
        %v680 = vpop.f32.mrf.mxu0
        %v681 = vpop.f32.mrf.mxu0
        %v682 = vadd.f32 %v427, %v681
        %v683 = vpop.f32.mrf.mxu0
        %684 = vmatprep.mubr.bf16.mxu0 0
        %685 = vmatmul.mubr.bf16.gmra.mxu0 %v497
        %v686 = vpop.f32.mrf.mxu0
        %v687 = vadd.f32 %v427, %v686
        %v688 = vpop.f32.mrf.mxu0
        %v689 = vpop.f32.mrf.mxu0
        %v690 = vadd.f32 %v427, %v689
        %v691 = vpop.f32.mrf.mxu0
        %692 = vmatprep.mubr.bf16.mxu0 0
        %693 = vmatmul.mubr.bf16.gmra.mxu0 %v500
        %v694 = vpop.f32.mrf.mxu0
        %v695 = vadd.f32 %v427, %v694
        %v696 = vpop.f32.mrf.mxu0
        %v697 = vpop.f32.mrf.mxu0
        %v698 = vadd.f32 %v427, %v697
        %v699 = vpop.f32.mrf.mxu0
        %700 = vmatprep.mubr.bf16.mxu0 0
        %701 = vmatmul.mubr.bf16.gmra.mxu0 %v503
        %v702 = vpop.f32.mrf.mxu0
        %v703 = vadd.f32 %v427, %v702
        %v704 = vpop.f32.mrf.mxu0
        %v705 = vpop.f32.mrf.mxu0
        %v706 = vadd.f32 %v427, %v705
        %v707 = vpop.f32.mrf.mxu0
        %708 = vmatprep.mubr.bf16.mxu0 0
        %709 = vmatmul.mubr.bf16.gmra.mxu0 %v506
        %v710 = vpop.f32.mrf.mxu0
        %v711 = vadd.f32 %v427, %v710
        %v712 = vpop.f32.mrf.mxu0
        %v713 = vpop.f32.mrf.mxu0
        %v714 = vadd.f32 %v427, %v713
        %v715 = vpop.f32.mrf.mxu0
        %716 = vmatprep.mubr.bf16.mxu0 0
        %717 = vmatmul.mubr.bf16.gmra.mxu0 %v509
        %v718 = vpop.f32.mrf.mxu0
        %v719 = vadd.f32 %v427, %v718
        %v720 = vpop.f32.mrf.mxu0
        %v721 = vpop.f32.mrf.mxu0
        %v722 = vadd.f32 %v427, %v721
        %v723 = vpop.f32.mrf.mxu0
        %724 = vmatprep.mubr.bf16.mxu0 0
        %725 = vmatmul.mubr.bf16.gmra.mxu0 %v512
        %v726 = vpop.f32.mrf.mxu0
        %v727 = vadd.f32 %v427, %v726
        %v728 = vpop.f32.mrf.mxu0
        %v729 = vpop.f32.mrf.mxu0
        %v730 = vadd.f32 %v427, %v729
        %v731 = vpop.f32.mrf.mxu0
        %732 = vmatprep.mubr.bf16.mxu0 0
        %733 = vmatmul.mubr.bf16.gmra.mxu0 %v515
        %v734 = vpop.f32.mrf.mxu0
        %v735 = vadd.f32 %v427, %v734
        %v736 = vpop.f32.mrf.mxu0
        %v737 = vpop.f32.mrf.mxu0
        %v738 = vadd.f32 %v427, %v737
        %v739 = vpop.f32.mrf.mxu0
        %740 = vmatprep.mubr.bf16.mxu0 0
        %741 = vmatmul.mubr.bf16.gmra.mxu0 %v518
        %v742 = vpop.f32.mrf.mxu0
        %v743 = vadd.f32 %v427, %v742
        %v744 = vpop.f32.mrf.mxu0
        %v745 = vpop.f32.mrf.mxu0
        %v746 = vadd.f32 %v427, %v745
        %v747 = vpop.f32.mrf.mxu0
        %748 = vmatprep.mubr.bf16.mxu0 0
        %749 = vmatmul.mubr.bf16.gmra.mxu0 %v521
        %v750 = vpop.f32.mrf.mxu0
        %v751 = vadd.f32 %v427, %v750
        %v752 = vpop.f32.mrf.mxu0
        %v753 = vpop.f32.mrf.mxu0
        %v754 = vadd.f32 %v427, %v753
        %v755 = vpop.f32.mrf.mxu0
        %756 = vmatprep.mubr.bf16.mxu0 0
        %757 = vmatmul.mubr.bf16.gmra.mxu0 %v524
        %v758 = vpop.f32.mrf.mxu0
        %v759 = vadd.f32 %v427, %v758
        %v760 = vpop.f32.mrf.mxu0
        %v761 = vpop.f32.mrf.mxu0
        %v762 = vadd.f32 %v427, %v761
        %v763 = vpop.f32.mrf.mxu0
        %764 = vmatprep.mubr.bf16.mxu0 0
        %765 = vmatmul.mubr.bf16.gmra.mxu0 %v527
        %v766 = vpop.f32.mrf.mxu0
        %v767 = vadd.f32 %v427, %v766
        %v768 = vpop.f32.mrf.mxu0
        %v769 = vpop.f32.mrf.mxu0
        %v770 = vadd.f32 %v427, %v769
        %v771 = vpop.f32.mrf.mxu0
        %772 = vmatprep.mubr.bf16.mxu0 0
        %773 = vmatmul.mubr.bf16.gmra.mxu0 %v530
        %v774 = vpop.f32.mrf.mxu0
        %v775 = vadd.f32 %v427, %v774
        %v776 = vpop.f32.mrf.mxu0
        %v777 = vpop.f32.mrf.mxu0
        %v778 = vadd.f32 %v427, %v777
        %v779 = vpop.f32.mrf.mxu0
        %780 = vmatprep.mubr.bf16.mxu0 0
        %781 = vmatmul.mubr.bf16.gmra.mxu0 %v533
        %v782 = vpop.f32.mrf.mxu0
        %v783 = vadd.f32 %v427, %v782
        %v784 = vpop.f32.mrf.mxu0
        %v785 = vpop.f32.mrf.mxu0
        %v786 = vadd.f32 %v427, %v785
        %v787 = vpop.f32.mrf.mxu0
        %788 = vmatprep.mubr.bf16.mxu0 0
        %789 = vmatmul.mubr.bf16.gmra.mxu0 %v536
        %v790 = vpop.f32.mrf.mxu0
        %v791 = vadd.f32 %v427, %v790
        %v792 = vpop.f32.mrf.mxu0
        %v793 = vpop.f32.mrf.mxu0
        %v794 = vadd.f32 %v427, %v793
        %v795 = vpop.f32.mrf.mxu0
        %796 = vmatprep.mubr.bf16.mxu0 0
        %797 = vmatmul.mubr.bf16.gmra.mxu0 %v539
        %v798 = vpop.f32.mrf.mxu0
        %v799 = vadd.f32 %v427, %v798
        %v800 = vpop.f32.mrf.mxu0
        %v801 = vpop.f32.mrf.mxu0
        %v802 = vadd.f32 %v427, %v801
        %v803 = vpop.f32.mrf.mxu0
        %804 = vmatprep.mubr.bf16.mxu0 0
        %805 = vmatmul.mubr.bf16.gmra.mxu0 %v542
        %v806 = vpop.f32.mrf.mxu0
        %v807 = vadd.f32 %v427, %v806
        %v808 = vpop.f32.mrf.mxu0
        %v809 = vpop.f32.mrf.mxu0
        %v810 = vadd.f32 %v427, %v809
        %v811 = vpop.f32.mrf.mxu0
        %812 = vmatprep.mubr.bf16.mxu0 0
        %813 = vmatmul.mubr.bf16.gmra.mxu0 %v545
        %v814 = vpop.f32.mrf.mxu0
        %v815 = vadd.f32 %v427, %v814
        %v816 = vpop.f32.mrf.mxu0
        %v817 = vpop.f32.mrf.mxu0
        %v818 = vadd.f32 %v427, %v817
        %v819 = vpop.f32.mrf.mxu0
        %820 = vmatprep.mubr.bf16.mxu0 0
        %821 = vmatmul.mubr.bf16.gmra.mxu0 %v548
        %v822 = vpop.f32.mrf.mxu0
        %v823 = vadd.f32 %v427, %v822
        %v824 = vpop.f32.mrf.mxu0
        %v825 = vpop.f32.mrf.mxu0
        %v826 = vadd.f32 %v427, %v825
        %v827 = vpop.f32.mrf.mxu0
        %828 = vmatprep.mubr.bf16.mxu0 0
        %829 = vmatmul.mubr.bf16.gmra.mxu0 %v551
        %v830 = vpop.f32.mrf.mxu0
        %v831 = vadd.f32 %v427, %v830
        %v832 = vpop.f32.mrf.mxu0
        %v833 = vpop.f32.mrf.mxu0
        %v834 = vadd.f32 %v427, %v833
        %v835 = vpop.f32.mrf.mxu0
        %836 = vmatprep.mubr.bf16.mxu0 0
        %837 = vmatmul.mubr.bf16.gmra.mxu0 %v554
        %v838 = vpop.f32.mrf.mxu0
        %v839 = vadd.f32 %v427, %v838
        %v840 = vpop.f32.mrf.mxu0
        %v841 = vpop.f32.mrf.mxu0
        %v842 = vadd.f32 %v427, %v841
        %v843 = vpop.f32.mrf.mxu0
        %844 = vdwg.mxu0
        %v845 = vmax.f32 %v591, 0.0
        %v846 = vmax.f32 %v594, 0.0
        %v847 = vmax.f32 %v599, 0.0
        %v848 = vmax.f32 %v602, 0.0
        %v849 = vmax.f32 %v607, 0.0
        %v850 = vmax.f32 %v610, 0.0
        %v851 = vmax.f32 %v615, 0.0
        %v852 = vmax.f32 %v618, 0.0
        %v853 = vmax.f32 %v623, 0.0
        %v854 = vmax.f32 %v626, 0.0
        %v855 = vmax.f32 %v631, 0.0
        %v856 = vmax.f32 %v634, 0.0
        %v857 = vmax.f32 %v639, 0.0
        %v858 = vmax.f32 %v642, 0.0
        %v859 = vmax.f32 %v647, 0.0
        %v860 = vmax.f32 %v650, 0.0
        %v861 = vmax.f32 %v655, 0.0
        %v862 = vmax.f32 %v658, 0.0
        %v863 = vmax.f32 %v663, 0.0
        %v864 = vmax.f32 %v666, 0.0
        %v865 = vmax.f32 %v671, 0.0
        %v866 = vmax.f32 %v674, 0.0
        %v867 = vmax.f32 %v679, 0.0
        %v868 = vmax.f32 %v682, 0.0
        %v869 = vmax.f32 %v687, 0.0
        %v870 = vmax.f32 %v690, 0.0
        %v871 = vmax.f32 %v695, 0.0
        %v872 = vmax.f32 %v698, 0.0
        %v873 = vmax.f32 %v703, 0.0
        %v874 = vmax.f32 %v706, 0.0
        %v875 = vmax.f32 %v711, 0.0
        %v876 = vmax.f32 %v714, 0.0
        %v877 = vmax.f32 %v719, 0.0
        %v878 = vmax.f32 %v722, 0.0
        %v879 = vmax.f32 %v727, 0.0
        %v880 = vmax.f32 %v730, 0.0
        %v881 = vmax.f32 %v735, 0.0
        %v882 = vmax.f32 %v738, 0.0
        %v883 = vmax.f32 %v743, 0.0
        %v884 = vmax.f32 %v746, 0.0
        %v885 = vmax.f32 %v751, 0.0
        %v886 = vmax.f32 %v754, 0.0
        %v887 = vmax.f32 %v759, 0.0
        %v888 = vmax.f32 %v762, 0.0
        %v889 = vmax.f32 %v767, 0.0
        %v890 = vmax.f32 %v770, 0.0
        %v891 = vmax.f32 %v775, 0.0
        %v892 = vmax.f32 %v778, 0.0
        %v893 = vmax.f32 %v783, 0.0
        %v894 = vmax.f32 %v786, 0.0
        %v895 = vmax.f32 %v791, 0.0
        %v896 = vmax.f32 %v794, 0.0
        %v897 = vmax.f32 %v799, 0.0
        %v898 = vmax.f32 %v802, 0.0
        %v899 = vmax.f32 %v807, 0.0
        %v900 = vmax.f32 %v810, 0.0
        %v901 = vmax.f32 %v815, 0.0
        %v902 = vmax.f32 %v818, 0.0
        %v903 = vmax.f32 %v823, 0.0
        %v904 = vmax.f32 %v826, 0.0
        %v905 = vmax.f32 %v831, 0.0
        %v906 = vmax.f32 %v834, 0.0
        %v907 = vmax.f32 %v839, 0.0
        %v908 = vmax.f32 %v842, 0.0
        %v909 = vld [vmem:[%s294] sm:$0xff]
        %v910 = vld [vmem:[%s294 + $0x8] sm:$0xff]
        %v911 = vld [vmem:[%s294 + $0x10] sm:$0xff]
        %v912 = vld [vmem:[%s294 + $0x18] sm:$0xff]
        %v913 = vld [vmem:[%s294 + $0x20] sm:$0xff]
        %v914 = vld [vmem:[%s294 + $0x28] sm:$0xff]
        %v915 = vld [vmem:[%s294 + $0x30] sm:$0xff]
        %v916 = vld [vmem:[%s294 + $0x38] sm:$0xff]
        %v917 = vld [vmem:[%s294 + $0x40] sm:$0xff]
        %v918 = vld [vmem:[%s294 + $0x48] sm:$0xff]
        %v919 = vld [vmem:[%s294 + $0x50] sm:$0xff]
        %v920 = vld [vmem:[%s294 + $0x58] sm:$0xff]
        %v921 = vld [vmem:[%s294 + $0x60] sm:$0xff]
        %v922 = vld [vmem:[%s294 + $0x68] sm:$0xff]
        %v923 = vld [vmem:[%s294 + $0x70] sm:$0xff]
        %v924 = vld [vmem:[%s294 + $0x78] sm:$0xff]
        %v925 = vld [vmem:[%s294 + $0x80] sm:$0xff]
        %v926 = vld [vmem:[%s294 + $0x88] sm:$0xff]
        %v927 = vld [vmem:[%s294 + $0x90] sm:$0xff]
        %v928 = vld [vmem:[%s294 + $0x98] sm:$0xff]
        %v929 = vld [vmem:[%s294 + $0xa0] sm:$0xff]
        %v930 = vld [vmem:[%s294 + $0xa8] sm:$0xff]
        %v931 = vld [vmem:[%s294 + $0xb0] sm:$0xff]
        %v932 = vld [vmem:[%s294 + $0xb8] sm:$0xff]
        %v933 = vld [vmem:[%s294 + $0xc0] sm:$0xff]
        %v934 = vld [vmem:[%s294 + $0xc8] sm:$0xff]
        %v935 = vld [vmem:[%s294 + $0xd0] sm:$0xff]
        %v936 = vld [vmem:[%s294 + $0xd8] sm:$0xff]
        %v937 = vld [vmem:[%s294 + $0xe0] sm:$0xff]
        %v938 = vld [vmem:[%s294 + $0xe8] sm:$0xff]
        %v939 = vld [vmem:[%s294 + $0xf0] sm:$0xff]
        %v940 = vld [vmem:[%s294 + $0xf8] sm:$0xff]
        %v941 = vld [vmem:[%s294 + $0x100] sm:$0xff]
        %v942 = vld [vmem:[%s294 + $0x108] sm:$0xff]
        %v943 = vld [vmem:[%s294 + $0x110] sm:$0xff]
        %v944 = vld [vmem:[%s294 + $0x118] sm:$0xff]
        %v945 = vld [vmem:[%s294 + $0x120] sm:$0xff]
        %v946 = vld [vmem:[%s294 + $0x128] sm:$0xff]
        %v947 = vld [vmem:[%s294 + $0x130] sm:$0xff]
        %v948 = vld [vmem:[%s294 + $0x138] sm:$0xff]
        %v949 = vld [vmem:[%s294 + $0x140] sm:$0xff]
        %v950 = vld [vmem:[%s294 + $0x148] sm:$0xff]
        %v951 = vld [vmem:[%s294 + $0x150] sm:$0xff]
        %v952 = vld [vmem:[%s294 + $0x158] sm:$0xff]
        %v953 = vld [vmem:[%s294 + $0x160] sm:$0xff]
        %v954 = vld [vmem:[%s294 + $0x168] sm:$0xff]
        %v955 = vld [vmem:[%s294 + $0x170] sm:$0xff]
        %v956 = vld [vmem:[%s294 + $0x178] sm:$0xff]
        %v957 = vld [vmem:[%s294 + $0x180] sm:$0xff]
        %v958 = vld [vmem:[%s294 + $0x188] sm:$0xff]
        %v959 = vld [vmem:[%s294 + $0x190] sm:$0xff]
        %v960 = vld [vmem:[%s294 + $0x198] sm:$0xff]
        %v961 = vld [vmem:[%s294 + $0x1a0] sm:$0xff]
        %v962 = vld [vmem:[%s294 + $0x1a8] sm:$0xff]
        %v963 = vld [vmem:[%s294 + $0x1b0] sm:$0xff]
        %v964 = vld [vmem:[%s294 + $0x1b8] sm:$0xff]
        %v965 = vld [vmem:[%s294 + $0x1c0] sm:$0xff]
        %v966 = vld [vmem:[%s294 + $0x1c8] sm:$0xff]
        %v967 = vld [vmem:[%s294 + $0x1d0] sm:$0xff]
        %v968 = vld [vmem:[%s294 + $0x1d8] sm:$0xff]
        %v969 = vld [vmem:[%s294 + $0x1e0] sm:$0xff]
        %v970 = vld [vmem:[%s294 + $0x1e8] sm:$0xff]
        %v971 = vld [vmem:[%s294 + $0x1f0] sm:$0xff]
        %v972 = vld [vmem:[%s294 + $0x1f8] sm:$0xff]
        %1037 = vrot.lane.b32.xlu0 %v845, 32
        %v1038 = vpop.permute.xlu0 %1037
        %1039 = vrot.lane.b32.xlu0 %v846, 32
        %v1040 = vpop.permute.xlu0 %1039
        %1041 = vrot.lane.b32.xlu0 %v847, 32
        %v1042 = vpop.permute.xlu0 %1041
        %1043 = vrot.lane.b32.xlu0 %v848, 32
        %v1044 = vpop.permute.xlu0 %1043
        %1045 = vrot.lane.b32.xlu0 %v849, 32
        %v1046 = vpop.permute.xlu0 %1045
        %1047 = vrot.lane.b32.xlu0 %v850, 32
        %v1048 = vpop.permute.xlu0 %1047
        %1049 = vrot.lane.b32.xlu0 %v851, 32
        %v1050 = vpop.permute.xlu0 %1049
        %1051 = vrot.lane.b32.xlu0 %v852, 32
        %v1052 = vpop.permute.xlu0 %1051
        %1053 = vrot.lane.b32.xlu0 %v853, 32
        %v1054 = vpop.permute.xlu0 %1053
        %1055 = vrot.lane.b32.xlu0 %v854, 32
        %v1056 = vpop.permute.xlu0 %1055
        %1057 = vrot.lane.b32.xlu0 %v855, 32
        %v1058 = vpop.permute.xlu0 %1057
        %1059 = vrot.lane.b32.xlu0 %v856, 32
        %v1060 = vpop.permute.xlu0 %1059
        %1061 = vrot.lane.b32.xlu0 %v857, 32
        %v1062 = vpop.permute.xlu0 %1061
        %1063 = vrot.lane.b32.xlu0 %v858, 32
        %v1064 = vpop.permute.xlu0 %1063
        %1065 = vrot.lane.b32.xlu0 %v859, 32
        %v1066 = vpop.permute.xlu0 %1065
        %1067 = vrot.lane.b32.xlu0 %v860, 32
        %v1068 = vpop.permute.xlu0 %1067
        %1069 = vrot.lane.b32.xlu0 %v861, 32
        %v1070 = vpop.permute.xlu0 %1069
        %1071 = vrot.lane.b32.xlu0 %v862, 32
        %v1072 = vpop.permute.xlu0 %1071
        %1073 = vrot.lane.b32.xlu0 %v863, 32
        %v1074 = vpop.permute.xlu0 %1073
        %1075 = vrot.lane.b32.xlu0 %v864, 32
        %v1076 = vpop.permute.xlu0 %1075
        %1077 = vrot.lane.b32.xlu0 %v865, 32
        %v1078 = vpop.permute.xlu0 %1077
        %1079 = vrot.lane.b32.xlu0 %v866, 32
        %v1080 = vpop.permute.xlu0 %1079
        %1081 = vrot.lane.b32.xlu0 %v867, 32
        %v1082 = vpop.permute.xlu0 %1081
        %1083 = vrot.lane.b32.xlu0 %v868, 32
        %v1084 = vpop.permute.xlu0 %1083
        %1085 = vrot.lane.b32.xlu0 %v869, 32
        %v1086 = vpop.permute.xlu0 %1085
        %1087 = vrot.lane.b32.xlu0 %v870, 32
        %v1088 = vpop.permute.xlu0 %1087
        %1089 = vrot.lane.b32.xlu0 %v871, 32
        %v1090 = vpop.permute.xlu0 %1089
        %1091 = vrot.lane.b32.xlu0 %v872, 32
        %v1092 = vpop.permute.xlu0 %1091
        %1093 = vrot.lane.b32.xlu0 %v873, 32
        %v1094 = vpop.permute.xlu0 %1093
        %1095 = vrot.lane.b32.xlu0 %v874, 32
        %v1096 = vpop.permute.xlu0 %1095
        %1097 = vrot.lane.b32.xlu0 %v875, 32
        %v1098 = vpop.permute.xlu0 %1097
        %1099 = vrot.lane.b32.xlu0 %v876, 32
        %v1100 = vpop.permute.xlu0 %1099
        %1101 = vrot.lane.b32.xlu0 %v877, 32
        %v1102 = vpop.permute.xlu0 %1101
        %1103 = vrot.lane.b32.xlu0 %v878, 32
        %v1104 = vpop.permute.xlu0 %1103
        %1105 = vrot.lane.b32.xlu0 %v879, 32
        %v1106 = vpop.permute.xlu0 %1105
        %1107 = vrot.lane.b32.xlu0 %v880, 32
        %v1108 = vpop.permute.xlu0 %1107
        %1109 = vrot.lane.b32.xlu0 %v881, 32
        %v1110 = vpop.permute.xlu0 %1109
        %1111 = vrot.lane.b32.xlu0 %v882, 32
        %v1112 = vpop.permute.xlu0 %1111
        %1113 = vrot.lane.b32.xlu0 %v883, 32
        %v1114 = vpop.permute.xlu0 %1113
        %1115 = vrot.lane.b32.xlu0 %v884, 32
        %v1116 = vpop.permute.xlu0 %1115
        %1117 = vrot.lane.b32.xlu0 %v885, 32
        %v1118 = vpop.permute.xlu0 %1117
        %1119 = vrot.lane.b32.xlu0 %v886, 32
        %v1120 = vpop.permute.xlu0 %1119
        %1121 = vrot.lane.b32.xlu0 %v887, 32
        %v1122 = vpop.permute.xlu0 %1121
        %1123 = vrot.lane.b32.xlu0 %v888, 32
        %v1124 = vpop.permute.xlu0 %1123
        %1125 = vrot.lane.b32.xlu0 %v889, 32
        %v1126 = vpop.permute.xlu0 %1125
        %1127 = vrot.lane.b32.xlu0 %v890, 32
        %v1128 = vpop.permute.xlu0 %1127
        %1129 = vrot.lane.b32.xlu0 %v891, 32
        %v1130 = vpop.permute.xlu0 %1129
        %1131 = vrot.lane.b32.xlu0 %v892, 32
        %v1132 = vpop.permute.xlu0 %1131
        %1133 = vrot.lane.b32.xlu0 %v893, 32
        %v1134 = vpop.permute.xlu0 %1133
        %1135 = vrot.lane.b32.xlu0 %v894, 32
        %v1136 = vpop.permute.xlu0 %1135
        %1137 = vrot.lane.b32.xlu0 %v895, 32
        %v1138 = vpop.permute.xlu0 %1137
        %1139 = vrot.lane.b32.xlu0 %v896, 32
        %v1140 = vpop.permute.xlu0 %1139
        %1141 = vrot.lane.b32.xlu0 %v897, 32
        %v1142 = vpop.permute.xlu0 %1141
        %1143 = vrot.lane.b32.xlu0 %v898, 32
        %v1144 = vpop.permute.xlu0 %1143
        %1145 = vrot.lane.b32.xlu0 %v899, 32
        %v1146 = vpop.permute.xlu0 %1145
        %1147 = vrot.lane.b32.xlu0 %v900, 32
        %v1148 = vpop.permute.xlu0 %1147
        %1149 = vrot.lane.b32.xlu0 %v901, 32
        %v1150 = vpop.permute.xlu0 %1149
        %1151 = vrot.lane.b32.xlu0 %v902, 32
        %v1152 = vpop.permute.xlu0 %1151
        %1153 = vrot.lane.b32.xlu0 %v903, 32
        %v1154 = vpop.permute.xlu0 %1153
        %1155 = vrot.lane.b32.xlu0 %v904, 32
        %v1156 = vpop.permute.xlu0 %1155
        %1157 = vrot.lane.b32.xlu0 %v905, 32
        %v1158 = vpop.permute.xlu0 %1157
        %1159 = vrot.lane.b32.xlu0 %v906, 32
        %v1160 = vpop.permute.xlu0 %1159
        %1161 = vrot.lane.b32.xlu0 %v907, 32
        %v1162 = vpop.permute.xlu0 %1161
        %1163 = vrot.lane.b32.xlu0 %v908, 32
        %v1164 = vpop.permute.xlu0 %1163
        %vm1229 = vcmask 261120
        %v1230 = vsel %vm1229, %v909, %v1038
        %v1231 = vsel %vm1229, %v910, %v1040
        %v1232 = vsel %vm1229, %v911, %v1042
        %v1233 = vsel %vm1229, %v912, %v1044
        %v1234 = vsel %vm1229, %v913, %v1046
        %v1235 = vsel %vm1229, %v914, %v1048
        %v1236 = vsel %vm1229, %v915, %v1050
        %v1237 = vsel %vm1229, %v916, %v1052
        %v1238 = vsel %vm1229, %v917, %v1054
        %v1239 = vsel %vm1229, %v918, %v1056
        %v1240 = vsel %vm1229, %v919, %v1058
        %v1241 = vsel %vm1229, %v920, %v1060
        %v1242 = vsel %vm1229, %v921, %v1062
        %v1243 = vsel %vm1229, %v922, %v1064
        %v1244 = vsel %vm1229, %v923, %v1066
        %v1245 = vsel %vm1229, %v924, %v1068
        %v1246 = vsel %vm1229, %v925, %v1070
        %v1247 = vsel %vm1229, %v926, %v1072
        %v1248 = vsel %vm1229, %v927, %v1074
        %v1249 = vsel %vm1229, %v928, %v1076
        %v1250 = vsel %vm1229, %v929, %v1078
        %v1251 = vsel %vm1229, %v930, %v1080
        %v1252 = vsel %vm1229, %v931, %v1082
        %v1253 = vsel %vm1229, %v932, %v1084
        %v1254 = vsel %vm1229, %v933, %v1086
        %v1255 = vsel %vm1229, %v934, %v1088
        %v1256 = vsel %vm1229, %v935, %v1090
        %v1257 = vsel %vm1229, %v936, %v1092
        %v1258 = vsel %vm1229, %v937, %v1094
        %v1259 = vsel %vm1229, %v938, %v1096
        %v1260 = vsel %vm1229, %v939, %v1098
        %v1261 = vsel %vm1229, %v940, %v1100
        %v1262 = vsel %vm1229, %v941, %v1102
        %v1263 = vsel %vm1229, %v942, %v1104
        %v1264 = vsel %vm1229, %v943, %v1106
        %v1265 = vsel %vm1229, %v944, %v1108
        %v1266 = vsel %vm1229, %v945, %v1110
        %v1267 = vsel %vm1229, %v946, %v1112
        %v1268 = vsel %vm1229, %v947, %v1114
        %v1269 = vsel %vm1229, %v948, %v1116
        %v1270 = vsel %vm1229, %v949, %v1118
        %v1271 = vsel %vm1229, %v950, %v1120
        %v1272 = vsel %vm1229, %v951, %v1122
        %v1273 = vsel %vm1229, %v952, %v1124
        %v1274 = vsel %vm1229, %v953, %v1126
        %v1275 = vsel %vm1229, %v954, %v1128
        %v1276 = vsel %vm1229, %v955, %v1130
        %v1277 = vsel %vm1229, %v956, %v1132
        %v1278 = vsel %vm1229, %v957, %v1134
        %v1279 = vsel %vm1229, %v958, %v1136
        %v1280 = vsel %vm1229, %v959, %v1138
        %v1281 = vsel %vm1229, %v960, %v1140
        %v1282 = vsel %vm1229, %v961, %v1142
        %v1283 = vsel %vm1229, %v962, %v1144
        %v1284 = vsel %vm1229, %v963, %v1146
        %v1285 = vsel %vm1229, %v964, %v1148
        %v1286 = vsel %vm1229, %v965, %v1150
        %v1287 = vsel %vm1229, %v966, %v1152
        %v1288 = vsel %vm1229, %v967, %v1154
        %v1289 = vsel %vm1229, %v968, %v1156
        %v1290 = vsel %vm1229, %v969, %v1158
        %v1291 = vsel %vm1229, %v970, %v1160
        %v1292 = vsel %vm1229, %v971, %v1162
        %v1293 = vsel %vm1229, %v972, %v1164
        %v1294 = vpack.c.bf16 %v1231, %v1230
        %v1295 = vpack.c.bf16 %v1233, %v1232
        %v1296 = vpack.c.bf16 %v1235, %v1234
        %v1297 = vpack.c.bf16 %v1237, %v1236
        %v1298 = vpack.c.bf16 %v1239, %v1238
        %v1299 = vpack.c.bf16 %v1241, %v1240
        %v1300 = vpack.c.bf16 %v1243, %v1242
        %v1301 = vpack.c.bf16 %v1245, %v1244
        %v1302 = vpack.c.bf16 %v1247, %v1246
        %v1303 = vpack.c.bf16 %v1249, %v1248
        %v1304 = vpack.c.bf16 %v1251, %v1250
        %v1305 = vpack.c.bf16 %v1253, %v1252
        %v1306 = vpack.c.bf16 %v1255, %v1254
        %v1307 = vpack.c.bf16 %v1257, %v1256
        %v1308 = vpack.c.bf16 %v1259, %v1258
        %v1309 = vpack.c.bf16 %v1261, %v1260
        %v1310 = vpack.c.bf16 %v1263, %v1262
        %v1311 = vpack.c.bf16 %v1265, %v1264
        %v1312 = vpack.c.bf16 %v1267, %v1266
        %v1313 = vpack.c.bf16 %v1269, %v1268
        %v1314 = vpack.c.bf16 %v1271, %v1270
        %v1315 = vpack.c.bf16 %v1273, %v1272
        %v1316 = vpack.c.bf16 %v1275, %v1274
        %v1317 = vpack.c.bf16 %v1277, %v1276
        %v1318 = vpack.c.bf16 %v1279, %v1278
        %v1319 = vpack.c.bf16 %v1281, %v1280
        %v1320 = vpack.c.bf16 %v1283, %v1282
        %v1321 = vpack.c.bf16 %v1285, %v1284
        %v1322 = vpack.c.bf16 %v1287, %v1286
        %v1323 = vpack.c.bf16 %v1289, %v1288
        %v1324 = vpack.c.bf16 %v1291, %v1290
        %v1325 = vpack.c.bf16 %v1293, %v1292
        %v1326 = vld [vmem:[%s4] sm:$0xf]
        %v1327 = vld [vmem:[%s4 + $0x4] sm:$0xf]
        %v1328 = vld [vmem:[%s5] sm:$0xff]
        %v1329 = vld [vmem:[%s5 + $0x8] sm:$0xff]
        %1331 = vset.pattern.permute.xlu0 0
        %1332 = vperm.xlu0 %1331, %v1328
        %v1333 = vpop.permute.xlu0 %1332
        %1336 = vset.pattern.permute.xlu0 0
        %1337 = vperm.xlu0 %1336, %v1329
        %v1338 = vpop.permute.xlu0 %1337
        %v1342 = vunpack.c.l.b16 %v1326
        %v1343 = vunpack.c.l.b16 %v1327
        %v1344 = vpack.c.b16 %v1343, %v1342
        %vm1345 = vcmask 523264
        %v1347 = vsel %vm1345, %v1344, 0
        %v1350 = vsel %vm1345, %v1294, 0
        %v1353 = vsel %vm1345, %v1295, 0
        %v1356 = vsel %vm1345, %v1296, 0
        %v1359 = vsel %vm1345, %v1297, 0
        %v1362 = vsel %vm1345, %v1298, 0
        %v1365 = vsel %vm1345, %v1299, 0
        %v1368 = vsel %vm1345, %v1300, 0
        %v1371 = vsel %vm1345, %v1301, 0
        %v1374 = vsel %vm1345, %v1302, 0
        %v1377 = vsel %vm1345, %v1303, 0
        %v1380 = vsel %vm1345, %v1304, 0
        %v1383 = vsel %vm1345, %v1305, 0
        %v1386 = vsel %vm1345, %v1306, 0
        %v1389 = vsel %vm1345, %v1307, 0
        %v1392 = vsel %vm1345, %v1308, 0
        %v1395 = vsel %vm1345, %v1309, 0
        %v1398 = vsel %vm1345, %v1310, 0
        %v1401 = vsel %vm1345, %v1311, 0
        %v1404 = vsel %vm1345, %v1312, 0
        %v1407 = vsel %vm1345, %v1313, 0
        %v1410 = vsel %vm1345, %v1314, 0
        %v1413 = vsel %vm1345, %v1315, 0
        %v1416 = vsel %vm1345, %v1316, 0
        %v1419 = vsel %vm1345, %v1317, 0
        %v1422 = vsel %vm1345, %v1318, 0
        %v1425 = vsel %vm1345, %v1319, 0
        %v1428 = vsel %vm1345, %v1320, 0
        %v1431 = vsel %vm1345, %v1321, 0
        %v1434 = vsel %vm1345, %v1322, 0
        %v1437 = vsel %vm1345, %v1323, 0
        %v1440 = vsel %vm1345, %v1324, 0
        %v1443 = vsel %vm1345, %v1325, 0
        %1445 = vmatprep.subr.bf16.mxu0 0
        %1446 = vmatpush1.bf16.xpose.msra.mxu0 %v1371
        %1447 = vmatprep.subr.bf16.mxu0 0
        %1448 = vmatpush1.bf16.xpose.msra.mxu0 %v1368
        %1449 = vmatprep.subr.bf16.mxu0 0
        %1450 = vmatpush1.bf16.xpose.msra.mxu0 %v1365
        %1451 = vmatprep.subr.bf16.mxu0 0
        %1452 = vmatpush1.bf16.xpose.msra.mxu0 %v1362
        %1453 = vmatprep.subr.bf16.mxu0 0
        %1454 = vmatpush1.bf16.xpose.msra.mxu0 %v1359
        %1455 = vmatprep.subr.bf16.mxu0 0
        %1456 = vmatpush1.bf16.xpose.msra.mxu0 %v1356
        %1457 = vmatprep.subr.bf16.mxu0 0
        %1458 = vmatpush1.bf16.xpose.msra.mxu0 %v1353
        %1459 = vmatprep.subr.bf16.mxu0 0
        %1460 = vmatpush1.bf16.xpose.msra.mxu0 %v1350
        %1461 = vmatprep.subr.bf16.mxu0 0
        %1462 = vmatpush2.bf16.xpose.msra.mxu0 %v1395
        %1463 = vmatprep.subr.bf16.mxu0 0
        %1464 = vmatpush2.bf16.xpose.msra.mxu0 %v1392
        %1465 = vmatprep.subr.bf16.mxu0 0
        %1466 = vmatpush2.bf16.xpose.msra.mxu0 %v1389
        %1467 = vmatprep.subr.bf16.mxu0 0
        %1468 = vmatpush2.bf16.xpose.msra.mxu0 %v1386
        %1469 = vmatprep.subr.bf16.mxu0 0
        %1470 = vmatpush2.bf16.xpose.msra.mxu0 %v1383
        %1471 = vmatprep.subr.bf16.mxu0 0
        %1472 = vmatpush2.bf16.xpose.msra.mxu0 %v1380
        %1473 = vmatprep.subr.bf16.mxu0 0
        %1474 = vmatpush2.bf16.xpose.msra.mxu0 %v1377
        %1475 = vmatprep.subr.bf16.mxu0 0
        %1476 = vmatpush2.bf16.xpose.msra.mxu0 %v1374
        %1477 = vmatprep.mubr.bf16.mxu0 0
        %1478 = vmatmul.mubr.bf16.gmra.mxu0 %v1347
        %v1479 = vpop.f32.mrf.mxu0
        %v1480 = vadd.f32 %v1333, %v1479
        %v1481 = vpop.f32.mrf.mxu0
        %v1482 = vadd.f32 %v1333, %v1481
        %v1483 = vpop.f32.mrf.mxu0
        %v1484 = vadd.f32 %v1338, %v1483
        %v1485 = vpop.f32.mrf.mxu0
        %v1486 = vadd.f32 %v1338, %v1485
        %1487 = vdwg.mxu0
        %1488 = vmatprep.subr.bf16.mxu0 0
        %1489 = vmatpush1.bf16.xpose.msra.mxu0 %v1419
        %1490 = vmatprep.subr.bf16.mxu0 0
        %1491 = vmatpush1.bf16.xpose.msra.mxu0 %v1416
        %1492 = vmatprep.subr.bf16.mxu0 0
        %1493 = vmatpush1.bf16.xpose.msra.mxu0 %v1413
        %1494 = vmatprep.subr.bf16.mxu0 0
        %1495 = vmatpush1.bf16.xpose.msra.mxu0 %v1410
        %1496 = vmatprep.subr.bf16.mxu0 0
        %1497 = vmatpush1.bf16.xpose.msra.mxu0 %v1407
        %1498 = vmatprep.subr.bf16.mxu0 0
        %1499 = vmatpush1.bf16.xpose.msra.mxu0 %v1404
        %1500 = vmatprep.subr.bf16.mxu0 0
        %1501 = vmatpush1.bf16.xpose.msra.mxu0 %v1401
        %1502 = vmatprep.subr.bf16.mxu0 0
        %1503 = vmatpush1.bf16.xpose.msra.mxu0 %v1398
        %1504 = vmatprep.subr.bf16.mxu0 0
        %1505 = vmatpush2.bf16.xpose.msra.mxu0 %v1443
        %1506 = vmatprep.subr.bf16.mxu0 0
        %1507 = vmatpush2.bf16.xpose.msra.mxu0 %v1440
        %1508 = vmatprep.subr.bf16.mxu0 0
        %1509 = vmatpush2.bf16.xpose.msra.mxu0 %v1437
        %1510 = vmatprep.subr.bf16.mxu0 0
        %1511 = vmatpush2.bf16.xpose.msra.mxu0 %v1434
        %1512 = vmatprep.subr.bf16.mxu0 0
        %1513 = vmatpush2.bf16.xpose.msra.mxu0 %v1431
        %1514 = vmatprep.subr.bf16.mxu0 0
        %1515 = vmatpush2.bf16.xpose.msra.mxu0 %v1428
        %1516 = vmatprep.subr.bf16.mxu0 0
        %1517 = vmatpush2.bf16.xpose.msra.mxu0 %v1425
        %1518 = vmatprep.subr.bf16.mxu0 0
        %1519 = vmatpush2.bf16.xpose.msra.mxu0 %v1422
        %1520 = vmatprep.mubr.bf16.mxu0 0
        %1521 = vmatmul.mubr.bf16.gmra.mxu0 %v1347
        %v1522 = vpop.f32.mrf.mxu0
        %v1523 = vadd.f32 %v1333, %v1522
        %v1524 = vpop.f32.mrf.mxu0
        %v1525 = vadd.f32 %v1333, %v1524
        %v1526 = vpop.f32.mrf.mxu0
        %v1527 = vadd.f32 %v1338, %v1526
        %v1528 = vpop.f32.mrf.mxu0
        %v1529 = vadd.f32 %v1338, %v1528
        %1530 = vdwg.mxu0
        %1531 = vst [vmem:[%s285] sm:$0xff] %v1480
        %1532 = vst [vmem:[%s285 + $0x8] sm:$0xff] %v1482
        %1533 = vst [vmem:[%s285 + $0x10] sm:$0xff] %v1523
        %1534 = vst [vmem:[%s285 + $0x18] sm:$0xff] %v1525
        %1535 = vst [vmem:[%s285 + $0x20] sm:$0xff] %v1484
        %1536 = vst [vmem:[%s285 + $0x28] sm:$0xff] %v1486
        %1537 = vst [vmem:[%s285 + $0x30] sm:$0xff] %v1527
        %1538 = vst [vmem:[%s285 + $0x38] sm:$0xff] %v1529
        %s1539 = sand.u32 %s164, 1
        %s1540 = scalar_lea.sflag [#allocation3], %s1539
        %s1541 = sand.u32 %s164, 1
        %s1542 = smul.addr %s1541, 64
        %s1543 = scalar_lea.vmem [#allocation2], %s1542
        // Predicated region
        $region45: #{tpu_custom_call.1} parent=43 // pred_check
          %p1544 = pneg %p174
        $region46: #{tpu_custom_call.1} parent=43 // pred_check_branch
          %1546 = sbr.rel (%p1544) target = $region48
        $region47: #{tpu_custom_call.1} parent=43 // pred_region
          %s1547 = smul.u32 4, %s20
          %s1549 = ssub.s32 1024, 1024
          %1550 = vsyncadd %s1540, %s1549
          %s1551 = smul.addr %s1547, 128
          %s1552 = scalar_lea.hbm %s6, %s1551
          %s1553 = sshll.u32 %s1543, 4
          %s1554 = int_to_ptr.vmem [resolvable:$true] %s1553
          %1559 = dma.vmem_to_hbm [thread:$0]  %s1554, 1024, %s1552, %s1540, 512, 1024, 32
        $region48: #{tpu_custom_call.1} parent=43 // pred_fallthru
          _
      $region44: #{tpu_custom_call.1} parent=5 // pred_fallthru
        _
      %p1560 = scmp.le.s32.totalorder 2, %s15
      // Predicated region
      $region49: #{tpu_custom_call.1} parent=5 // pred_check
        %p1561 = pneg %p1560
      $region50: #{tpu_custom_call.1} parent=5 // pred_check_branch
        %1563 = sbr.rel (%p1561) target = $region52
      $region51: #{tpu_custom_call.1} parent=5 // pred_region
        %s1564 = ssub.s32 %s15, 2
        // Predicated region
        $region53: #{tpu_custom_call.1} parent=51 // pred_check
          %p1565 = pneg %p180
        $region54: #{tpu_custom_call.1} parent=51 // pred_check_branch
          %1567 = sbr.rel (%p1565) target = $region56
        $region55: #{tpu_custom_call.1} parent=51 // pred_region
          %s1568 = sand.u32 %s165, 1
          %s1569 = scalar_lea.sflag [#allocation3], %s1568
          %s1570 = sand.u32 %s165, 1
          %s1571 = smul.addr %s1570, 64
          %s1572 = scalar_lea.vmem [#allocation2], %s1571
          %1573 = dma.done %s1569, 1024
        $region56: #{tpu_custom_call.1} parent=51 // pred_fallthru
          _
      $region52: #{tpu_custom_call.1} parent=5 // pred_fallthru
        _
    $region6: #{tpu_custom_call.1} parent=1 // loop_footer
      %s19 = sadd.s32 1, %s15
    $region7: #{tpu_custom_call.1} parent=1 // loop_footer_branch
      %14 = sbr.rel target = $region3
    $region8: #{tpu_custom_call.1} parent=1 // loop_exit
      _
    %1574 = vsyncpa [#allocation3], 1
    %s1575 = scalar_lea.sflag [#allocation3], 1
    %1576 = vsyncpa %s1575, 1

</llo_original>
